<compile_context>
chip_gen: v7x
topology: tpu7x:2x2x1
jax: 0.10.0
libtpu: 0.0.40
codegen_flags: <defaults>
</compile_context>

<pallas_src>
import functools

import jax
import jax.numpy as jnp
from jax import lax
from jax.experimental import pallas as pl
from jax.experimental.pallas import tpu as pltpu

_LANE = 128
_SUBLANE = 8


def _round_up(n, m):
    return ((n + m - 1) // m) * m


def _pad_last2(a, r, c):
    """Zero-pad the last two dims of `a` up to (r, c)."""
    pr = r - a.shape[-2]
    pc = c - a.shape[-1]
    if pr == 0 and pc == 0:
        return a
    pads = [(0, 0)] * (a.ndim - 2) + [(0, pr), (0, pc)]
    return jnp.pad(a, pads)


def _vmem_capacity_bytes():
    """Physical VMEM of the attached TPU; conservative fallback if unknown."""
    try:
        cap = getattr(pltpu.get_tpu_info(), "vmem_capacity_bytes", None)
        if cap:
            return int(cap)
    except Exception:
        pass
    return 64 << 20  # v7x per-core size: safe lower bound for all generations


def _const_spec(block_shape, index_map):
    """BlockSpec for a block whose index never changes across the grid.

    Single-buffer it: double-buffering a constant block is wasted VMEM since
    it is only DMA'd once.
    """
    try:
        return pl.BlockSpec(block_shape, index_map,
                            pipeline_mode=pl.Buffered(1))
    except (TypeError, AttributeError):  # older JAX without pipeline_mode
        return pl.BlockSpec(block_shape, index_map)


# ---------------------------------------------------------------------------
# Kernels
# ---------------------------------------------------------------------------

def _mlp_relu_resident_kernel(num_hidden_layers,
                              x_ref, w_in_ref, b_in_ref,
                              w_hs_ref, b_hs_ref,
                              w_out_ref, b_out_ref,
                              o_ref):
    """Fused MLP forward for one batch tile; all weights resident in VMEM."""
    compute_dtype = w_in_ref.dtype  # f32 or bf16 (set by wrapper)

    # Input projection + ReLU (f32 accumulation on the MXU).
    h = jnp.dot(x_ref[...], w_in_ref[...],
                preferred_element_type=jnp.float32) + b_in_ref[...]
    h = jnp.maximum(h, 0.0)

    # Hidden layers + hardtanh(0, 1) == clip to [0, 1].
    def layer(h_in, w, b):
        y = jnp.dot(h_in.astype(compute_dtype), w,
                    preferred_element_type=jnp.float32) + b
        return jnp.clip(y, 0.0, 1.0)

    def body(i, h_carry):
        return layer(h_carry, w_hs_ref[i], b_hs_ref[i])

    if num_hidden_layers == 1:
        h = layer(h, w_hs_ref[0], b_hs_ref[0])
    elif num_hidden_layers <= 4:
        # unroll=True: keeps LLO scheduler visibility while bounding the
        # activation-carry vreg live ranges (a bare Python for does not).
        h = lax.fori_loop(0, num_hidden_layers, body, h, unroll=True)
    else:
        h = lax.fori_loop(0, num_hidden_layers, body, h)

    # Output projection (no activation).
    out = jnp.dot(h.astype(compute_dtype), w_out_ref[...],
                  preferred_element_type=jnp.float32) + b_out_ref[...]
    o_ref[...] = out.astype(o_ref.dtype)


def _mlp_relu_stream_kernel(x_ref, w_in_ref, b_in_ref,
                            w_h_ref, b_h_ref,
                            w_out_ref, b_out_ref,
                            o_ref, h_ref):
    """Weight-streaming variant: one hidden layer per grid step along axis 1.

    The activation lives in a VMEM scratch that persists across the L axis;
    BlockSpec double-buffers the per-layer (H, H) weight DMA behind the
    previous layer's matmul.
    """
    l = pl.program_id(1)
    compute_dtype = w_in_ref.dtype

    @pl.when(l == 0)
    def _():
        h0 = jnp.dot(x_ref[...], w_in_ref[...],
                     preferred_element_type=jnp.float32) + b_in_ref[...]
        h_ref[...] = jnp.maximum(h0, 0.0)

    y = jnp.dot(h_ref[...].astype(compute_dtype), w_h_ref[0],
                preferred_element_type=jnp.float32) + b_h_ref[0]
    h_ref[...] = jnp.clip(y, 0.0, 1.0)

    @pl.when(l == pl.num_programs(1) - 1)
    def _():
        out = jnp.dot(h_ref[...].astype(compute_dtype), w_out_ref[...],
                      preferred_element_type=jnp.float32) + b_out_ref[...]
        o_ref[...] = out.astype(o_ref.dtype)


# ---------------------------------------------------------------------------
# Wrapper
# ---------------------------------------------------------------------------

def mlp_relu_forward(x, w_in, b_in, w_hs, b_hs, w_out, b_out,
                     *, compute_dtype=jnp.float32, force_streaming=False):
    """x: (B, F) f32. Weights in (in, out) layout; biases (1, out) / (L, 1, out).

    compute_dtype: jnp.float32 (exact) or jnp.bfloat16 (operands bf16,
    accumulation f32) for higher MXU throughput on v5e/v6e/v7x.
    force_streaming: force the per-layer weight-streaming path (testing).
    """
    B, F = x.shape
    H = w_in.shape[1]
    O = w_out.shape[1]
    L = w_hs.shape[0]
    out_dtype = x.dtype

    # ---- Lane-friendly padding (zero-padded lanes stay 0 through ReLU/clip)
    F_pad = _round_up(F, _LANE)
    H_pad = _round_up(H, _LANE)
    O_pad = _round_up(O, _LANE)

    xp = _pad_last2(x, B, F_pad).astype(compute_dtype)
    w_in_p = _pad_last2(w_in, F_pad, H_pad).astype(compute_dtype)
    w_hs_p = _pad_last2(w_hs, H_pad, H_pad).astype(compute_dtype)
    w_out_p = _pad_last2(w_out, H_pad, O_pad).astype(compute_dtype)
    # Biases stay f32 (added to the f32 accumulator).
    b_in_p = _pad_last2(b_in, 1, H_pad).astype(jnp.float32)
    b_hs_p = _pad_last2(b_hs, 1, H_pad).astype(jnp.float32)
    b_out_p = _pad_last2(b_out, 1, O_pad).astype(jnp.float32)

    # ---- Generation-aware VMEM accounting --------------------------------
    vmem_cap = _vmem_capacity_bytes()
    budget = int(vmem_cap * 0.85)     # ~110 MiB on v5e/v6e, ~54 MiB on v7x

    dsize = jnp.dtype(compute_dtype).itemsize
    osize = jnp.dtype(out_dtype).itemsize

    # Constant-index blocks are single-buffered (1x); streamed blocks 2x.
    const_bytes = ((F_pad * H_pad + H_pad * O_pad) * dsize
                   + (H_pad + O_pad) * 4)
    hidden_resident = L * (H_pad * H_pad * dsize + H_pad * 4)
    hidden_streamed = 2 * (H_pad * H_pad * dsize + H_pad * 4)

    def resident_bytes(tb):
        io = 2 * tb * F_pad * dsize + 2 * tb * O_pad * osize
        act = 2 * tb * H_pad * 4          # f32 activation working set
        return const_bytes + hidden_resident + io + act

    def streaming_bytes(tb):
        io = 2 * tb * F_pad * dsize + 2 * tb * O_pad * osize
        return const_bytes + hidden_streamed + io + 2 * tb * H_pad * 4

    # ---- Batch-tile selection ---------------------------------------------
    tb_cap = _round_up(B, _SUBLANE)
    tb_candidates = sorted(
        {min(c, tb_cap) for c in (512, 256, 128, 64, 32, 16, 8)}, reverse=True)
    # The v6e/v7x MXU is 256-wide: keep the M dimension >= 256 (bf16) /
    # 128 (f32) when the batch allows, preferring weight streaming over
    # tiny batch tiles.
    min_tb = 256 if dsize <= 2 else 128
    min_tb_eff = min(min_tb, tb_cap)

    TB, use_streaming = None, False
    if not force_streaming:
        for c in tb_candidates:          # resident weights at a full-MXU tile
            if c >= min_tb_eff and resident_bytes(c) <= budget:
                TB, use_streaming = c, False
                break
    if TB is None:
        for c in tb_candidates:          # stream hidden weights, big tile
            if streaming_bytes(c) <= budget:
                TB, use_streaming = c, True
                break
    if TB is None and not force_streaming:
        for c in tb_candidates:          # resident at whatever tile fits
            if resident_bytes(c) <= budget:
                TB, use_streaming = c, False
                break
    if TB is None:                       # best effort
        TB, use_streaming = tb_candidates[-1], True

    # Prefer >= 2 batch tiles so the "parallel" axis can shard across v7x's
    # two TensorCores, but never drop below the MXU-friendly floor.
    while ((_round_up(B, TB) // TB) == 1
           and TB // 2 >= max(_SUBLANE, min_tb_eff)
           and B > TB // 2):
        TB //= 2

    B_pad = _round_up(B, TB)
    if B_pad != B:
        xp = jnp.pad(xp, ((0, B_pad - B), (0, 0)))
    grid_b = B_pad // TB

    footprint = streaming_bytes(TB) if use_streaming else resident_bytes(TB)
    # Cover the footprint (+ headroom for compiler scratch) but never request
    # more than ~90% of physical VMEM (v7x: 64 MiB per core).
    vmem_limit = int(min(max(footprint + (8 << 20), 32 << 20),
                         int(vmem_cap * 0.9)))

    # ---- Build and launch ---------------------------------------------------
    if use_streaming:
        kernel = _mlp_relu_stream_kernel
        grid = (grid_b, L)
        in_specs = [
            pl.BlockSpec((TB, F_pad), lambda i, l: (i, 0)),              # x tile
            _const_spec((F_pad, H_pad), lambda i, l: (0, 0)),            # W_in
            _const_spec((1, H_pad), lambda i, l: (0, 0)),                # b_in
            pl.BlockSpec((1, H_pad, H_pad), lambda i, l: (l, 0, 0)),     # W_hs[l]
            pl.BlockSpec((1, 1, H_pad), lambda i, l: (l, 0, 0)),         # b_hs[l]
            _const_spec((H_pad, O_pad), lambda i, l: (0, 0)),            # W_out
            _const_spec((1, O_pad), lambda i, l: (0, 0)),                # b_out
        ]
        out_specs = pl.BlockSpec((TB, O_pad), lambda i, l: (i, 0))
        scratch_shapes = [pltpu.VMEM((TB, H_pad), jnp.float32)]
        dim_sem = ("parallel", "arbitrary")
    else:
        kernel = functools.partial(_mlp_relu_resident_kernel, L)
        grid = (grid_b,)
        in_specs = [
            pl.BlockSpec((TB, F_pad), lambda i: (i, 0)),                 # x tile
            _const_spec((F_pad, H_pad), lambda i: (0, 0)),               # W_in
            _const_spec((1, H_pad), lambda i: (0, 0)),                   # b_in
            _const_spec((L, H_pad, H_pad), lambda i: (0, 0, 0)),         # W_hs
            _const_spec((L, 1, H_pad), lambda i: (0, 0, 0)),             # b_hs
            _const_spec((H_pad, O_pad), lambda i: (0, 0)),               # W_out
            _const_spec((1, O_pad), lambda i: (0, 0)),                   # b_out
        ]
        out_specs = pl.BlockSpec((TB, O_pad), lambda i: (i, 0))
        scratch_shapes = []
        dim_sem = ("parallel",)

    out_padded = pl.pallas_call(
        kernel,
        out_shape=jax.ShapeDtypeStruct((B_pad, O_pad), out_dtype),
        grid=grid,
        in_specs=in_specs,
        out_specs=out_specs,
        scratch_shapes=scratch_shapes,
        compiler_params=pltpu.CompilerParams(
            dimension_semantics=dim_sem,
            vmem_limit_bytes=vmem_limit),
    )(xp, w_in_p, b_in_p, w_hs_p, b_hs_p, w_out_p, b_out_p)

    # Slice padding back off outside the kernel.
    return out_padded[:B, :O]


# ---------------------------------------------------------------------------
# Reference / init (mimics the PyTorch module)
# ---------------------------------------------------------------------------

def init_params(key, input_feature, hidden_nodes, output_features,
                num_hidden_layers):
    """Deterministic init mimicking nn.Linear's U(-1/sqrt(fan_in), 1/sqrt(fan_in))."""
    def linear(k, fan_in, fan_out):
        kw, kb = jax.random.split(k)
        bound = 1.0 / jnp.sqrt(fan_in)
        # Stored directly as (in, out) so the kernel does x @ W.
        w = jax.random.uniform(kw, (fan_in, fan_out), jnp.float32, -bound, bound)
        b = jax.random.uniform(kb, (1, fan_out), jnp.float32, -bound, bound)
        return w, b

    keys = jax.random.split(key, 2 + num_hidden_layers)
    w_in, b_in = linear(keys[0], input_feature, hidden_nodes)
    hs = [linear(keys[1 + i], hidden_nodes, hidden_nodes)
          for i in range(num_hidden_layers)]
    w_hs = jnp.stack([w for w, _ in hs], axis=0)            # (L, H, H)
    b_hs = jnp.stack([b for _, b in hs], axis=0)            # (L, 1, H)
    w_out, b_out = linear(keys[-1], hidden_nodes, output_features)
    return w_in, b_in, w_hs, b_hs, w_out, b_out


def reference_forward(x, w_in, b_in, w_hs, b_hs, w_out, b_out):
    """Plain-JAX reference matching the PyTorch forward (unscaled=False)."""
    h = jnp.maximum(x @ w_in + b_in, 0.0)
    for i in range(w_hs.shape[0]):
        h = jnp.clip(h @ w_hs[i] + b_hs[i], 0.0, 1.0)
    return h @ w_out + b_out


if __name__ == "__main__":
    # Module defaults: output_features=1, hidden_nodes=20.
    batch = 8
    input_feature = 32
    hidden_nodes = 20
    output_features = 1

    key = jax.random.PRNGKey(0)
    k_x, k_p1, k_p3 = jax.random.split(key, 3)
    x = jax.random.normal(k_x, (batch, input_feature), jnp.float32)

    # --- num_hidden_layers=1 (module default): resident-weights path ------
    params1 = init_params(k_p1, input_feature, hidden_nodes, output_features, 1)
    ref1 = reference_forward(x, *params1)
    out1 = jax.block_until_ready(mlp_relu_forward(x, *params1))
    assert out1.shape == (batch, output_features)
    assert jnp.allclose(out1, ref1, atol=1e-5, rtol=1e-5), "f32 L=1 mismatch"

    # --- num_hidden_layers=3: resident path with fori_loop(unroll=True) ---
    params3 = init_params(k_p3, input_feature, hidden_nodes, output_features, 3)
    ref3 = reference_forward(x, *params3)
    out3 = jax.block_until_ready(mlp_relu_forward(x, *params3))
    assert out3.shape == (batch, output_features)
    assert jnp.allclose(out3, ref3, atol=1e-5, rtol=1e-5), "f32 L=3 mismatch"

    # --- num_hidden_layers=3 with forced weight streaming (large-L path) --
    out3s = jax.block_until_ready(
        mlp_relu_forward(x, *params3, force_streaming=True))
    assert jnp.allclose(out3s, ref3, atol=1e-5, rtol=1e-5), "streaming mismatch"

    # --- bf16 operands / f32 accumulation fast path ------------------------
    out_bf16 = jax.block_until_ready(
        mlp_relu_forward(x, *params1, compute_dtype=jnp.bfloat16))
    assert out_bf16.shape == (batch, output_features)
    assert jnp.allclose(out_bf16, ref1, atol=5e-2, rtol=5e-2), "bf16 mismatch"

    print("KERNEL_OK")
</pallas_src>

<mosaic_0001>
module attributes {stable_mosaic.version = 11 : i64} {
  func.func @_mlp_relu_resident_kernel(%arg0: i32, %arg1: memref<8x128xf32, #tpu.memory_space<vmem>>, %arg2: memref<128x128xf32, #tpu.memory_space<vmem>>, %arg3: memref<1x128xf32, #tpu.memory_space<vmem>>, %arg4: memref<1x128x128xf32, #tpu.memory_space<vmem>>, %arg5: memref<1x1x128xf32, #tpu.memory_space<vmem>>, %arg6: memref<128x128xf32, #tpu.memory_space<vmem>>, %arg7: memref<1x128xf32, #tpu.memory_space<vmem>>, %arg8: memref<8x128xf32, #tpu.memory_space<vmem>>) attributes {dimension_semantics = [#tpu.dimension_semantics<parallel>], iteration_bounds = array<i64: 1>, scalar_prefetch = 0 : i64, scratch_operands = 0 : i64, tpu.core_type = #tpu.core_type<tc>, window_params = [{transform_indices = @transform_0, window_bounds = array<i64: 8, 128>}, {pipeline_mode = #tpu.pipeline_mode<synchronous>, transform_indices = @transform_1, window_bounds = array<i64: 128, 128>}, {pipeline_mode = #tpu.pipeline_mode<synchronous>, transform_indices = @transform_2, window_bounds = array<i64: 1, 128>}, {pipeline_mode = #tpu.pipeline_mode<synchronous>, transform_indices = @transform_3, window_bounds = array<i64: 1, 128, 128>}, {pipeline_mode = #tpu.pipeline_mode<synchronous>, transform_indices = @transform_4, window_bounds = array<i64: 1, 1, 128>}, {pipeline_mode = #tpu.pipeline_mode<synchronous>, transform_indices = @transform_5, window_bounds = array<i64: 128, 128>}, {pipeline_mode = #tpu.pipeline_mode<synchronous>, transform_indices = @transform_6, window_bounds = array<i64: 1, 128>}, {transform_indices = @transform_7, window_bounds = array<i64: 8, 128>}]} {
    %c0 = arith.constant 0 : index
    %c0_0 = arith.constant 0 : index
    %0 = vector.load %arg1[%c0, %c0_0] : memref<8x128xf32, #tpu.memory_space<vmem>>, vector<8x128xf32>
    %c0_1 = arith.constant 0 : index
    %c0_2 = arith.constant 0 : index
    %1 = vector.load %arg2[%c0_1, %c0_2] : memref<128x128xf32, #tpu.memory_space<vmem>>, vector<128x128xf32>
    %cst = arith.constant dense<0.000000e+00> : vector<8x128xf32>
    %2 = tpu.matmul %0, %1, %cst {dimension_numbers = #tpu.dot_dimension_numbers<[1], [0], [0], [1], [0, 0, 1, 1], [], []>} : vector<8x128xf32>, vector<128x128xf32>, vector<8x128xf32> -> vector<8x128xf32>
    %c0_3 = arith.constant 0 : index
    %c0_4 = arith.constant 0 : index
    %3 = vector.load %arg3[%c0_3, %c0_4] : memref<1x128xf32, #tpu.memory_space<vmem>>, vector<1x128xf32>
    %4 = vector.broadcast %3 : vector<1x128xf32> to vector<8x128xf32>
    %5 = arith.addf %2, %4 : vector<8x128xf32>
    %cst_5 = arith.constant 0.000000e+00 : f32
    %6 = vector.broadcast %cst_5 : f32 to vector<8x128xf32>
    %7 = arith.maximumf %5, %6 : vector<8x128xf32>
    %c0_6 = arith.constant 0 : index
    %c0_7 = arith.constant 0 : index
    %c0_8 = arith.constant 0 : index
    %8 = vector.load %arg4[%c0_6, %c0_7, %c0_8] : memref<1x128x128xf32, #tpu.memory_space<vmem>>, vector<1x128x128xf32>
    %9 = vector.shape_cast %8 : vector<1x128x128xf32> to vector<128x128xf32>
    %c0_9 = arith.constant 0 : index
    %c0_10 = arith.constant 0 : index
    %c0_11 = arith.constant 0 : index
    %10 = vector.load %arg5[%c0_9, %c0_10, %c0_11] : memref<1x1x128xf32, #tpu.memory_space<vmem>>, vector<1x1x128xf32>
    %11 = vector.shape_cast %10 : vector<1x1x128xf32> to vector<1x128xf32>
    %cst_12 = arith.constant dense<0.000000e+00> : vector<8x128xf32>
    %12 = tpu.matmul %7, %9, %cst_12 {dimension_numbers = #tpu.dot_dimension_numbers<[1], [0], [0], [1], [0, 0, 1, 1], [], []>} : vector<8x128xf32>, vector<128x128xf32>, vector<8x128xf32> -> vector<8x128xf32>
    %13 = vector.broadcast %11 : vector<1x128xf32> to vector<8x128xf32>
    %14 = arith.addf %12, %13 : vector<8x128xf32>
    %cst_13 = arith.constant 0.000000e+00 : f32
    %cst_14 = arith.constant 1.000000e+00 : f32
    %15 = vector.broadcast %cst_13 : f32 to vector<8x128xf32>
    %16 = arith.maximumf %15, %14 : vector<8x128xf32>
    %17 = vector.broadcast %cst_14 : f32 to vector<8x128xf32>
    %18 = arith.minimumf %17, %16 : vector<8x128xf32>
    %c0_15 = arith.constant 0 : index
    %c0_16 = arith.constant 0 : index
    %19 = vector.load %arg6[%c0_15, %c0_16] : memref<128x128xf32, #tpu.memory_space<vmem>>, vector<128x128xf32>
    %cst_17 = arith.constant dense<0.000000e+00> : vector<8x128xf32>
    %20 = tpu.matmul %18, %19, %cst_17 {dimension_numbers = #tpu.dot_dimension_numbers<[1], [0], [0], [1], [0, 0, 1, 1], [], []>} : vector<8x128xf32>, vector<128x128xf32>, vector<8x128xf32> -> vector<8x128xf32>
    %c0_18 = arith.constant 0 : index
    %c0_19 = arith.constant 0 : index
    %21 = vector.load %arg7[%c0_18, %c0_19] : memref<1x128xf32, #tpu.memory_space<vmem>>, vector<1x128xf32>
    %22 = vector.broadcast %21 : vector<1x128xf32> to vector<8x128xf32>
    %23 = arith.addf %20, %22 : vector<8x128xf32>
    %c0_20 = arith.constant 0 : index
    %c0_21 = arith.constant 0 : index
    %24 = vector.load %arg8[%c0_20, %c0_21] : memref<8x128xf32, #tpu.memory_space<vmem>>, vector<8x128xf32>
    tpu.vector_store %arg8[%c0_20, %c0_21], %23 {strides = array<i32>} : memref<8x128xf32, #tpu.memory_space<vmem>>, vector<8x128xf32>,
    return
  }
  func.func @transform_0(%arg0: i32) -> (i32, i32) {
    %c0_i32 = arith.constant 0 : i32
    %c0_i32_0 = arith.constant 0 : i32
    return %arg0, %c0_i32 : i32, i32
  }
  func.func @transform_1(%arg0: i32) -> (i32, i32) {
    %c0_i32 = arith.constant 0 : i32
    %c0_i32_0 = arith.constant 0 : i32
    %c0_i32_1 = arith.constant 0 : i32
    return %c0_i32, %c0_i32_0 : i32, i32
  }
  func.func @transform_2(%arg0: i32) -> (i32, i32) {
    %c0_i32 = arith.constant 0 : i32
    %c0_i32_0 = arith.constant 0 : i32
    %c0_i32_1 = arith.constant 0 : i32
    return %c0_i32, %c0_i32_0 : i32, i32
  }
  func.func @transform_3(%arg0: i32) -> (i32, i32, i32) {
    %c0_i32 = arith.constant 0 : i32
    %c0_i32_0 = arith.constant 0 : i32
    %c0_i32_1 = arith.constant 0 : i32
    %c0_i32_2 = arith.constant 0 : i32
    return %c0_i32, %c0_i32_0, %c0_i32_1 : i32, i32, i32
  }
  func.func @transform_4(%arg0: i32) -> (i32, i32, i32) {
    %c0_i32 = arith.constant 0 : i32
    %c0_i32_0 = arith.constant 0 : i32
    %c0_i32_1 = arith.constant 0 : i32
    %c0_i32_2 = arith.constant 0 : i32
    return %c0_i32, %c0_i32_0, %c0_i32_1 : i32, i32, i32
  }
  func.func @transform_5(%arg0: i32) -> (i32, i32) {
    %c0_i32 = arith.constant 0 : i32
    %c0_i32_0 = arith.constant 0 : i32
    %c0_i32_1 = arith.constant 0 : i32
    return %c0_i32, %c0_i32_0 : i32, i32
  }
  func.func @transform_6(%arg0: i32) -> (i32, i32) {
    %c0_i32 = arith.constant 0 : i32
    %c0_i32_0 = arith.constant 0 : i32
    %c0_i32_1 = arith.constant 0 : i32
    return %c0_i32, %c0_i32_0 : i32, i32
  }
  func.func @transform_7(%arg0: i32) -> (i32, i32) {
    %c0_i32 = arith.constant 0 : i32
    %c0_i32_0 = arith.constant 0 : i32
    return %arg0, %c0_i32 : i32, i32
  }
}

</mosaic_0001>

<llo_original>
// kernel: tpu_custom_call.1
$region0: #{tpu_custom_call.1}
  #allocation0 [shape = 'u32[]', space=smem, size = 0x4, offset = 0x4, fixed_abs, tag = 'smem constant byte address 0x4 - core index']
  #allocation1 [shape = 'u32[144,128]{1,0:T(1,128)}', space=vmem, size = 0x12000, scoped, tag = 'internal scratch']
  %s0 = inlined_call_operand.hbm [shape: f32[8,128], index: 0, kind: input, shape index: {}]
  %s1 = inlined_call_operand.hbm [shape: f32[128,128], index: 1, kind: input, shape index: {}]
  %s2 = inlined_call_operand.vmem [shape: f32[1,128], index: 2, kind: input, shape index: {}]
  %s3 = inlined_call_operand.hbm [shape: f32[1,128,128], index: 3, kind: input, shape index: {}]
  %s4 = inlined_call_operand.vmem [shape: f32[1,1,128], index: 4, kind: input, shape index: {}]
  %s5 = inlined_call_operand.hbm [shape: f32[128,128], index: 5, kind: input, shape index: {}]
  %s6 = inlined_call_operand.vmem [shape: f32[1,128], index: 6, kind: input, shape index: {}]
  %s7 = inlined_call_operand.hbm [shape: f32[8,128], index: 7, kind: output, shape index: {}]
  %s8 = sld [smem:[#allocation0]]
  $region54: #{tpu_custom_call.1} parent=0
    _
  %s10 = ssub.s32 1, %s8
  %s11 = scalar_select 0, %s10, %s8
  $region1: #{tpu_custom_call.1} parent=0
    #allocation2 [shape = 'u8[4096]{0}', space=vmem, size = 0x1000, scoped, tag = 'input window, operand 0, single buffered']
    #allocation3 [shape = 's32[1]{0}', space=sflag, size = 0x4, scoped, tag = 'scoped memory for tpu_custom_call.1']
    #allocation4 [shape = 's32[1]{0}', space=sflag, size = 0x4, scoped, tag = 'scoped memory for tpu_custom_call.1']
    #allocation5 [shape = 'u8[65536]{0}', space=vmem, size = 0x10000, scoped, tag = 'input window, operand 1, single buffered']
    #allocation6 [shape = 's32[1]{0}', space=sflag, size = 0x4, scoped, tag = 'scoped memory for tpu_custom_call.1']
    #allocation7 [shape = 'u8[65536]{0}', space=vmem, size = 0x10000, scoped, tag = 'input window, operand 3, single buffered']
    #allocation8 [shape = 'u8[65536]{0}', space=vmem, size = 0x10000, scoped, tag = 'input window, operand 5, single buffered']
    #allocation9 [shape = 's32[1]{0}', space=sflag, size = 0x4, scoped, tag = 'scoped memory for tpu_custom_call.1']
    #allocation10 [shape = 'u8[4096]{0}', space=vmem, size = 0x1000, scoped, tag = 'output window, operand 0, single buffered']
    %12 = vsyncpa [#allocation3], 0
    %13 = vsyncpa [#allocation6], 0
    %14 = vsyncpa [#allocation9], 0
    %15 = vsyncpa [#allocation4], 0
    // Predicated region
    $region2: #{tpu_custom_call.1} parent=1 // pred_check
      _
    $region3: #{tpu_custom_call.1} parent=1 // pred_check_branch
      %17 = sbr.rel (0) target = $region5
    $region4: #{tpu_custom_call.1} parent=1 // pred_region
      %s19 = ssub.s32 128, 128
      %20 = vsyncadd [#allocation3], %s19
      %s22 = sshll.u32 [#allocation2], 4
      %s23 = int_to_ptr.vmem [resolvable:$true] %s22
      %25 = dma.hbm_to_vmem [thread:$0]  %s0, 128, %s23, [#allocation3]
    $region5: #{tpu_custom_call.1} parent=1 // pred_fallthru
      _
    // Predicated region
    $region6: #{tpu_custom_call.1} parent=1 // pred_check
      _
    $region7: #{tpu_custom_call.1} parent=1 // pred_check_branch
      %27 = sbr.rel (0) target = $region9
    $region8: #{tpu_custom_call.1} parent=1 // pred_region
      %s29 = ssub.s32 2048, 2048
      %30 = vsyncadd [#allocation6], %s29
      %s31 = sshll.u32 [#allocation5], 4
      %s32 = int_to_ptr.vmem [resolvable:$true] %s31
      %37 = dma.hbm_to_vmem [thread:$0]  %s1, 2048, %s32, [#allocation6], 128, 128, 8
    $region9: #{tpu_custom_call.1} parent=1 // pred_fallthru
      _
    // Predicated region
    $region10: #{tpu_custom_call.1} parent=1 // pred_check
      _
    $region11: #{tpu_custom_call.1} parent=1 // pred_check_branch
      %39 = sbr.rel (0) target = $region13
    $region12: #{tpu_custom_call.1} parent=1 // pred_region
      _
    $region13: #{tpu_custom_call.1} parent=1 // pred_fallthru
      _
    // Predicated region
    $region14: #{tpu_custom_call.1} parent=1 // pred_check
      _
    $region15: #{tpu_custom_call.1} parent=1 // pred_check_branch
      %41 = sbr.rel (0) target = $region17
    $region16: #{tpu_custom_call.1} parent=1 // pred_region
      %s43 = ssub.s32 2048, 2048
      %44 = vsyncadd [#allocation6], %s43
      %s45 = sshll.u32 [#allocation7], 4
      %s46 = int_to_ptr.vmem [resolvable:$true] %s45
      %51 = dma.hbm_to_vmem [thread:$0]  %s3, 2048, %s46, [#allocation6], 128, 128, 8
    $region17: #{tpu_custom_call.1} parent=1 // pred_fallthru
      _
    // Predicated region
    $region18: #{tpu_custom_call.1} parent=1 // pred_check
      _
    $region19: #{tpu_custom_call.1} parent=1 // pred_check_branch
      %53 = sbr.rel (0) target = $region21
    $region20: #{tpu_custom_call.1} parent=1 // pred_region
      _
    $region21: #{tpu_custom_call.1} parent=1 // pred_fallthru
      _
    // Predicated region
    $region22: #{tpu_custom_call.1} parent=1 // pred_check
      _
    $region23: #{tpu_custom_call.1} parent=1 // pred_check_branch
      %55 = sbr.rel (0) target = $region25
    $region24: #{tpu_custom_call.1} parent=1 // pred_region
      %s57 = ssub.s32 2048, 2048
      %58 = vsyncadd [#allocation9], %s57
      %s59 = sshll.u32 [#allocation8], 4
      %s60 = int_to_ptr.vmem [resolvable:$true] %s59
      %65 = dma.hbm_to_vmem [thread:$0]  %s5, 2048, %s60, [#allocation9], 128, 128, 8
    $region25: #{tpu_custom_call.1} parent=1 // pred_fallthru
      _
    // Predicated region
    $region26: #{tpu_custom_call.1} parent=1 // pred_check
      _
    $region27: #{tpu_custom_call.1} parent=1 // pred_check_branch
      %67 = sbr.rel (0) target = $region29
    $region28: #{tpu_custom_call.1} parent=1 // pred_region
      _
    $region29: #{tpu_custom_call.1} parent=1 // pred_fallthru
      _
    // Predicated region
    $region30: #{tpu_custom_call.1} parent=1 // pred_check
      _
    $region31: #{tpu_custom_call.1} parent=1 // pred_check_branch
      %69 = sbr.rel (0) target = $region33
    $region32: #{tpu_custom_call.1} parent=1 // pred_region
      %70 = dma.done [#allocation3], 128
    $region33: #{tpu_custom_call.1} parent=1 // pred_fallthru
      _
    // Predicated region
    $region34: #{tpu_custom_call.1} parent=1 // pred_check
      _
    $region35: #{tpu_custom_call.1} parent=1 // pred_check_branch
      %72 = sbr.rel (0) target = $region37
    $region36: #{tpu_custom_call.1} parent=1 // pred_region
      %73 = dma.done [#allocation6], 2048
    $region37: #{tpu_custom_call.1} parent=1 // pred_fallthru
      _
    // Predicated region
    $region38: #{tpu_custom_call.1} parent=1 // pred_check
      _
    $region39: #{tpu_custom_call.1} parent=1 // pred_check_branch
      %75 = sbr.rel (0) target = $region41
    $region40: #{tpu_custom_call.1} parent=1 // pred_region
      %76 = dma.done [#allocation6], 2048
    $region41: #{tpu_custom_call.1} parent=1 // pred_fallthru
      _
    // Predicated region
    $region42: #{tpu_custom_call.1} parent=1 // pred_check
      _
    $region43: #{tpu_custom_call.1} parent=1 // pred_check_branch
      %78 = sbr.rel (0) target = $region45
    $region44: #{tpu_custom_call.1} parent=1 // pred_region
      %79 = dma.done [#allocation9], 2048
    $region45: #{tpu_custom_call.1} parent=1 // pred_fallthru
      _
    %v80 = vld [vmem:[#allocation2] sm:$0xff]
    %v81 = vld [vmem:[#allocation5] sm:$0xff]
    %v82 = vld [vmem:[#allocation5 + $0x8] sm:$0xff]
    %v83 = vld [vmem:[#allocation5 + $0x10] sm:$0xff]
    %v84 = vld [vmem:[#allocation5 + $0x18] sm:$0xff]
    %v85 = vld [vmem:[#allocation5 + $0x20] sm:$0xff]
    %v86 = vld [vmem:[#allocation5 + $0x28] sm:$0xff]
    %v87 = vld [vmem:[#allocation5 + $0x30] sm:$0xff]
    %v88 = vld [vmem:[#allocation5 + $0x38] sm:$0xff]
    %v89 = vld [vmem:[#allocation5 + $0x40] sm:$0xff]
    %v90 = vld [vmem:[#allocation5 + $0x48] sm:$0xff]
    %v91 = vld [vmem:[#allocation5 + $0x50] sm:$0xff]
    %v92 = vld [vmem:[#allocation5 + $0x58] sm:$0xff]
    %v93 = vld [vmem:[#allocation5 + $0x60] sm:$0xff]
    %v94 = vld [vmem:[#allocation5 + $0x68] sm:$0xff]
    %v95 = vld [vmem:[#allocation5 + $0x70] sm:$0xff]
    %v96 = vld [vmem:[#allocation5 + $0x78] sm:$0xff]
    %v97 = vld [vmem:[%s2] sm:$0x1]
    %v99 = vlaneseq
    %v100 = vshrl.u32 %v99, 7
    %v101 = vsub.s32 0, %v100
    %v102 = vrot.slane %v97, %v101
    %104 = vmatprep.subr.mxu0 0.0
    %105 = vmatpush1.msra.mxu0 %v81
    %106 = vmatprep.subr.mxu0 0.0
    %107 = vmatpush1.msra.mxu0 %v82
    %108 = vmatprep.subr.mxu0 0.0
    %109 = vmatpush1.msra.mxu0 %v83
    %110 = vmatprep.subr.mxu0 0.0
    %111 = vmatpush1.msra.mxu0 %v84
    %112 = vmatprep.subr.mxu0 0.0
    %113 = vmatpush1.msra.mxu0 %v85
    %114 = vmatprep.subr.mxu0 0.0
    %115 = vmatpush1.msra.mxu0 %v86
    %116 = vmatprep.subr.mxu0 0.0
    %117 = vmatpush1.msra.mxu0 %v87
    %118 = vmatprep.subr.mxu0 0.0
    %119 = vmatpush1.msra.mxu0 %v88
    %120 = vmatprep.subr.mxu0 0.0
    %121 = vmatpush1.msra.mxu0 %v89
    %122 = vmatprep.subr.mxu0 0.0
    %123 = vmatpush1.msra.mxu0 %v90
    %124 = vmatprep.subr.mxu0 0.0
    %125 = vmatpush1.msra.mxu0 %v91
    %126 = vmatprep.subr.mxu0 0.0
    %127 = vmatpush1.msra.mxu0 %v92
    %128 = vmatprep.subr.mxu0 0.0
    %129 = vmatpush1.msra.mxu0 %v93
    %130 = vmatprep.subr.mxu0 0.0
    %131 = vmatpush1.msra.mxu0 %v94
    %132 = vmatprep.subr.mxu0 0.0
    %133 = vmatpush1.msra.mxu0 %v95
    %134 = vmatprep.subr.mxu0 0.0
    %135 = vmatpush1.msra.mxu0 %v96
    %136 = vmatprep.subr.mxu0 0.0
    %137 = vmatpush1.msra.mxu0 0.0
    %138 = vmatprep.subr.mxu0 0.0
    %139 = vmatpush1.msra.mxu0 0.0
    %140 = vmatprep.subr.mxu0 0.0
    %141 = vmatpush1.msra.mxu0 0.0
    %142 = vmatprep.subr.mxu0 0.0
    %143 = vmatpush1.msra.mxu0 0.0
    %144 = vmatprep.subr.mxu0 0.0
    %145 = vmatpush1.msra.mxu0 0.0
    %146 = vmatprep.subr.mxu0 0.0
    %147 = vmatpush1.msra.mxu0 0.0
    %148 = vmatprep.subr.mxu0 0.0
    %149 = vmatpush1.msra.mxu0 0.0
    %150 = vmatprep.subr.mxu0 0.0
    %151 = vmatpush1.msra.mxu0 0.0
    %152 = vmatprep.subr.mxu0 0.0
    %153 = vmatpush1.msra.mxu0 0.0
    %154 = vmatprep.subr.mxu0 0.0
    %155 = vmatpush1.msra.mxu0 0.0
    %156 = vmatprep.subr.mxu0 0.0
    %157 = vmatpush1.msra.mxu0 0.0
    %158 = vmatprep.subr.mxu0 0.0
    %159 = vmatpush1.msra.mxu0 0.0
    %160 = vmatprep.subr.mxu0 0.0
    %161 = vmatpush1.msra.mxu0 0.0
    %162 = vmatprep.subr.mxu0 0.0
    %163 = vmatpush1.msra.mxu0 0.0
    %164 = vmatprep.subr.mxu0 0.0
    %165 = vmatpush1.msra.mxu0 0.0
    %166 = vmatprep.subr.mxu0 0.0
    %167 = vmatpush1.msra.mxu0 0.0
    %168 = vmatprep.mubr.f32.mxu0 0.0
    %169 = vmatmul.mubr.f32.gmra.mrb[0].mxu0 %v80
    %v170 = vpop.f32.mrb[0].mxu0
    %v171 = vadd.f32 %v102, %v170
    %v172 = vpop.f32.mrb[0].mxu0
    %173 = vdwg.mxu0
    %v174 = vmax.f32 %v171, 0.0
    %v175 = vld [vmem:[#allocation7] sm:$0xff]
    %v176 = vld [vmem:[#allocation7 + $0x8] sm:$0xff]
    %v177 = vld [vmem:[#allocation7 + $0x10] sm:$0xff]
    %v178 = vld [vmem:[#allocation7 + $0x18] sm:$0xff]
    %v179 = vld [vmem:[#allocation7 + $0x20] sm:$0xff]
    %v180 = vld [vmem:[#allocation7 + $0x28] sm:$0xff]
    %v181 = vld [vmem:[#allocation7 + $0x30] sm:$0xff]
    %v182 = vld [vmem:[#allocation7 + $0x38] sm:$0xff]
    %v183 = vld [vmem:[#allocation7 + $0x40] sm:$0xff]
    %v184 = vld [vmem:[#allocation7 + $0x48] sm:$0xff]
    %v185 = vld [vmem:[#allocation7 + $0x50] sm:$0xff]
    %v186 = vld [vmem:[#allocation7 + $0x58] sm:$0xff]
    %v187 = vld [vmem:[#allocation7 + $0x60] sm:$0xff]
    %v188 = vld [vmem:[#allocation7 + $0x68] sm:$0xff]
    %v189 = vld [vmem:[#allocation7 + $0x70] sm:$0xff]
    %v190 = vld [vmem:[#allocation7 + $0x78] sm:$0xff]
    %v191 = vld [vmem:[%s4] sm:$0x1]
    %v193 = vlaneseq
    %v194 = vshrl.u32 %v193, 7
    %v195 = vsub.s32 0, %v194
    %v196 = vrot.slane %v191, %v195
    %198 = vmatprep.subr.mxu0 0.0
    %199 = vmatpush1.msra.mxu0 %v175
    %200 = vmatprep.subr.mxu0 0.0
    %201 = vmatpush1.msra.mxu0 %v176
    %202 = vmatprep.subr.mxu0 0.0
    %203 = vmatpush1.msra.mxu0 %v177
    %204 = vmatprep.subr.mxu0 0.0
    %205 = vmatpush1.msra.mxu0 %v178
    %206 = vmatprep.subr.mxu0 0.0
    %207 = vmatpush1.msra.mxu0 %v179
    %208 = vmatprep.subr.mxu0 0.0
    %209 = vmatpush1.msra.mxu0 %v180
    %210 = vmatprep.subr.mxu0 0.0
    %211 = vmatpush1.msra.mxu0 %v181
    %212 = vmatprep.subr.mxu0 0.0
    %213 = vmatpush1.msra.mxu0 %v182
    %214 = vmatprep.subr.mxu0 0.0
    %215 = vmatpush1.msra.mxu0 %v183
    %216 = vmatprep.subr.mxu0 0.0
    %217 = vmatpush1.msra.mxu0 %v184
    %218 = vmatprep.subr.mxu0 0.0
    %219 = vmatpush1.msra.mxu0 %v185
    %220 = vmatprep.subr.mxu0 0.0
    %221 = vmatpush1.msra.mxu0 %v186
    %222 = vmatprep.subr.mxu0 0.0
    %223 = vmatpush1.msra.mxu0 %v187
    %224 = vmatprep.subr.mxu0 0.0
    %225 = vmatpush1.msra.mxu0 %v188
    %226 = vmatprep.subr.mxu0 0.0
    %227 = vmatpush1.msra.mxu0 %v189
    %228 = vmatprep.subr.mxu0 0.0
    %229 = vmatpush1.msra.mxu0 %v190
    %230 = vmatprep.subr.mxu0 0.0
    %231 = vmatpush1.msra.mxu0 0.0
    %232 = vmatprep.subr.mxu0 0.0
    %233 = vmatpush1.msra.mxu0 0.0
    %234 = vmatprep.subr.mxu0 0.0
    %235 = vmatpush1.msra.mxu0 0.0
    %236 = vmatprep.subr.mxu0 0.0
    %237 = vmatpush1.msra.mxu0 0.0
    %238 = vmatprep.subr.mxu0 0.0
    %239 = vmatpush1.msra.mxu0 0.0
    %240 = vmatprep.subr.mxu0 0.0
    %241 = vmatpush1.msra.mxu0 0.0
    %242 = vmatprep.subr.mxu0 0.0
    %243 = vmatpush1.msra.mxu0 0.0
    %244 = vmatprep.subr.mxu0 0.0
    %245 = vmatpush1.msra.mxu0 0.0
    %246 = vmatprep.subr.mxu0 0.0
    %247 = vmatpush1.msra.mxu0 0.0
    %248 = vmatprep.subr.mxu0 0.0
    %249 = vmatpush1.msra.mxu0 0.0
    %250 = vmatprep.subr.mxu0 0.0
    %251 = vmatpush1.msra.mxu0 0.0
    %252 = vmatprep.subr.mxu0 0.0
    %253 = vmatpush1.msra.mxu0 0.0
    %254 = vmatprep.subr.mxu0 0.0
    %255 = vmatpush1.msra.mxu0 0.0
    %256 = vmatprep.subr.mxu0 0.0
    %257 = vmatpush1.msra.mxu0 0.0
    %258 = vmatprep.subr.mxu0 0.0
    %259 = vmatpush1.msra.mxu0 0.0
    %260 = vmatprep.subr.mxu0 0.0
    %261 = vmatpush1.msra.mxu0 0.0
    %262 = vmatprep.mubr.f32.mxu0 0.0
    %263 = vmatmul.mubr.f32.gmra.mrb[0].mxu0 %v174
    %v264 = vpop.f32.mrb[0].mxu0
    %v265 = vadd.f32 %v196, %v264
    %v266 = vpop.f32.mrb[0].mxu0
    %267 = vdwg.mxu0
    %v268 = vmax.f32 %v265, 0.0
    %v269 = vmin.f32 %v268, 1.0
    %v270 = vld [vmem:[#allocation8] sm:$0xff]
    %v271 = vld [vmem:[#allocation8 + $0x8] sm:$0xff]
    %v272 = vld [vmem:[#allocation8 + $0x10] sm:$0xff]
    %v273 = vld [vmem:[#allocation8 + $0x18] sm:$0xff]
    %v274 = vld [vmem:[#allocation8 + $0x20] sm:$0xff]
    %v275 = vld [vmem:[#allocation8 + $0x28] sm:$0xff]
    %v276 = vld [vmem:[#allocation8 + $0x30] sm:$0xff]
    %v277 = vld [vmem:[#allocation8 + $0x38] sm:$0xff]
    %v278 = vld [vmem:[#allocation8 + $0x40] sm:$0xff]
    %v279 = vld [vmem:[#allocation8 + $0x48] sm:$0xff]
    %v280 = vld [vmem:[#allocation8 + $0x50] sm:$0xff]
    %v281 = vld [vmem:[#allocation8 + $0x58] sm:$0xff]
    %v282 = vld [vmem:[#allocation8 + $0x60] sm:$0xff]
    %v283 = vld [vmem:[#allocation8 + $0x68] sm:$0xff]
    %v284 = vld [vmem:[#allocation8 + $0x70] sm:$0xff]
    %v285 = vld [vmem:[#allocation8 + $0x78] sm:$0xff]
    %v286 = vld [vmem:[%s6] sm:$0x1]
    %v288 = vlaneseq
    %v289 = vshrl.u32 %v288, 7
    %v290 = vsub.s32 0, %v289
    %v291 = vrot.slane %v286, %v290
    %293 = vmatprep.subr.mxu0 0.0
    %294 = vmatpush1.msra.mxu0 %v270
    %295 = vmatprep.subr.mxu0 0.0
    %296 = vmatpush1.msra.mxu0 %v271
    %297 = vmatprep.subr.mxu0 0.0
    %298 = vmatpush1.msra.mxu0 %v272
    %299 = vmatprep.subr.mxu0 0.0
    %300 = vmatpush1.msra.mxu0 %v273
    %301 = vmatprep.subr.mxu0 0.0
    %302 = vmatpush1.msra.mxu0 %v274
    %303 = vmatprep.subr.mxu0 0.0
    %304 = vmatpush1.msra.mxu0 %v275
    %305 = vmatprep.subr.mxu0 0.0
    %306 = vmatpush1.msra.mxu0 %v276
    %307 = vmatprep.subr.mxu0 0.0
    %308 = vmatpush1.msra.mxu0 %v277
    %309 = vmatprep.subr.mxu0 0.0
    %310 = vmatpush1.msra.mxu0 %v278
    %311 = vmatprep.subr.mxu0 0.0
    %312 = vmatpush1.msra.mxu0 %v279
    %313 = vmatprep.subr.mxu0 0.0
    %314 = vmatpush1.msra.mxu0 %v280
    %315 = vmatprep.subr.mxu0 0.0
    %316 = vmatpush1.msra.mxu0 %v281
    %317 = vmatprep.subr.mxu0 0.0
    %318 = vmatpush1.msra.mxu0 %v282
    %319 = vmatprep.subr.mxu0 0.0
    %320 = vmatpush1.msra.mxu0 %v283
    %321 = vmatprep.subr.mxu0 0.0
    %322 = vmatpush1.msra.mxu0 %v284
    %323 = vmatprep.subr.mxu0 0.0
    %324 = vmatpush1.msra.mxu0 %v285
    %325 = vmatprep.subr.mxu0 0.0
    %326 = vmatpush1.msra.mxu0 0.0
    %327 = vmatprep.subr.mxu0 0.0
    %328 = vmatpush1.msra.mxu0 0.0
    %329 = vmatprep.subr.mxu0 0.0
    %330 = vmatpush1.msra.mxu0 0.0
    %331 = vmatprep.subr.mxu0 0.0
    %332 = vmatpush1.msra.mxu0 0.0
    %333 = vmatprep.subr.mxu0 0.0
    %334 = vmatpush1.msra.mxu0 0.0
    %335 = vmatprep.subr.mxu0 0.0
    %336 = vmatpush1.msra.mxu0 0.0
    %337 = vmatprep.subr.mxu0 0.0
    %338 = vmatpush1.msra.mxu0 0.0
    %339 = vmatprep.subr.mxu0 0.0
    %340 = vmatpush1.msra.mxu0 0.0
    %341 = vmatprep.subr.mxu0 0.0
    %342 = vmatpush1.msra.mxu0 0.0
    %343 = vmatprep.subr.mxu0 0.0
    %344 = vmatpush1.msra.mxu0 0.0
    %345 = vmatprep.subr.mxu0 0.0
    %346 = vmatpush1.msra.mxu0 0.0
    %347 = vmatprep.subr.mxu0 0.0
    %348 = vmatpush1.msra.mxu0 0.0
    %349 = vmatprep.subr.mxu0 0.0
    %350 = vmatpush1.msra.mxu0 0.0
    %351 = vmatprep.subr.mxu0 0.0
    %352 = vmatpush1.msra.mxu0 0.0
    %353 = vmatprep.subr.mxu0 0.0
    %354 = vmatpush1.msra.mxu0 0.0
    %355 = vmatprep.subr.mxu0 0.0
    %356 = vmatpush1.msra.mxu0 0.0
    %357 = vmatprep.mubr.f32.mxu0 0.0
    %358 = vmatmul.mubr.f32.gmra.mrb[0].mxu0 %v269
    %v359 = vpop.f32.mrb[0].mxu0
    %v360 = vadd.f32 %v291, %v359
    %v361 = vpop.f32.mrb[0].mxu0
    %362 = vdwg.mxu0
    %363 = vst [vmem:[#allocation10] sm:$0xff] %v360
    // Predicated region
    $region46: #{tpu_custom_call.1} parent=1 // pred_check
      _
    $region47: #{tpu_custom_call.1} parent=1 // pred_check_branch
      %365 = sbr.rel (0) target = $region49
    $region48: #{tpu_custom_call.1} parent=1 // pred_region
      %s367 = ssub.s32 128, 128
      %368 = vsyncadd [#allocation4], %s367
      %s370 = sshll.u32 [#allocation10], 4
      %s371 = int_to_ptr.vmem [resolvable:$true] %s370
      %373 = dma.vmem_to_hbm [thread:$0]  %s371, 128, %s7, [#allocation4]
    $region49: #{tpu_custom_call.1} parent=1 // pred_fallthru
      _
    // Predicated region
    $region50: #{tpu_custom_call.1} parent=1 // pred_check
      _
    $region51: #{tpu_custom_call.1} parent=1 // pred_check_branch
      %375 = sbr.rel (0) target = $region53
    $region52: #{tpu_custom_call.1} parent=1 // pred_region
      %376 = dma.done [#allocation4], 128
    $region53: #{tpu_custom_call.1} parent=1 // pred_fallthru
      _
    %377 = vsyncpa [#allocation3], 1
    %378 = vsyncpa [#allocation6], 1
    %379 = vsyncpa [#allocation9], 1
    %380 = vsyncpa [#allocation4], 1

</llo_original>
